<compile_context>
chip_gen: v6e
topology: v6e:2x2x1
jax: 0.10.0
libtpu: 0.0.40
codegen_flags: <defaults>
</compile_context>

<pallas_src>
import math

import jax
import jax.numpy as jnp
from jax import lax
from jax.experimental import pallas as pl
from jax.experimental.pallas import tpu as pltpu


# ----------------------------- hardware-aware sizing -----------------------------
def _vmem_capacity_bytes():
    """Physical per-core VMEM: 128 MiB on v5e/v6e, 64 MiB on v7x."""
    try:
        return int(pltpu.get_tpu_info().vmem_capacity_bytes)
    except Exception:          # conservative fallback: assume v7x-sized VMEM
        return 64 << 20


def _vmem_budget(per_step_bytes, scratch_bytes, ceiling):
    """Scoped-VMEM limit: headroom over the per-step footprint, capped below physical
    VMEM so Mosaic keeps room for internal scratch / semaphores / pipeline buffers."""
    est = 6 * per_step_bytes + scratch_bytes + (2 << 20)   # 6x: (8,128) padding + buffers
    return int(min(max(est, 16 << 20), ceiling))


def _pick_tile(total, candidates, fits=lambda t: True):
    """Largest candidate that divides `total` and fits the VMEM budget; falls back to
    the smallest divisor among the candidates, else the full extent."""
    fallback = total
    for c in candidates:                      # descending order
        if c <= total and total % c == 0:
            if fits(c):
                return c
            fallback = c
    # TODO(synk): for totals with no nice divisor, switch to pl.cdiv grids + tail masking.
    return fallback


def _shrink_for_two_programs(tile, total):
    """Shrink a parallel tile so the grid extent is >= 2 (keeps both v7x TCs busy)."""
    while total // tile < 2 and tile > 8:
        nxt = tile // 2
        if nxt < 8 or total % nxt != 0:
            break
        tile = nxt
    return tile


def _spec(shape, index_map, buffers=None):
    """BlockSpec, optionally with an explicit pipeline buffer count."""
    if buffers is None:
        return pl.BlockSpec(shape, index_map)
    return pl.BlockSpec(shape, index_map, pipeline_mode=pl.Buffered(buffers))


# --------------------------- Stage 1: fused QKV projection ---------------------------
def _qkv_proj_kernel(x_ref, w_ref, b_ref, q_ref, k_ref, v_ref):
    # x_ref: (TM, H)   w_ref: (H, 3H)   b_ref: (1, 3H)   q/k/v_ref: (TM, H)
    h = q_ref.shape[-1]
    qkv = jnp.dot(x_ref[...], w_ref[...],
                  preferred_element_type=jnp.float32) + b_ref[...]
    q_ref[...] = qkv[:, :h].astype(q_ref.dtype)
    k_ref[...] = qkv[:, h:2 * h].astype(k_ref.dtype)
    v_ref[...] = qkv[:, 2 * h:].astype(v_ref.dtype)


# --------------------------- Stage 2: flash attention ---------------------------
def _flash_attn_kernel(q_ref, k_ref, v_ref, o_ref, m_sc, l_sc, acc_sc):
    ki = pl.program_id(2)

    @pl.when(ki == 0)
    def _():
        m_sc[...] = jnp.full_like(m_sc, -jnp.inf)
        l_sc[...] = jnp.zeros_like(l_sc)
        acc_sc[...] = jnp.zeros_like(acc_sc)

    q = q_ref[0]                      # (TQ, H)  (1/sqrt(H) already folded into q)
    k = k_ref[0]                      # (TK, H)
    v = v_ref[0]                      # (TK, H)

    # scores = q @ k^T: contract dim 1 with dim 1, no materialized transpose of k.
    s = lax.dot_general(q, k, dimension_numbers=(((1,), (1,)), ((), ())),
                        preferred_element_type=jnp.float32)       # (TQ, TK)

    m_prev = m_sc[...]
    m_new = jnp.maximum(m_prev, jnp.max(s, axis=-1, keepdims=True))
    alpha = jnp.exp(m_prev - m_new)
    p = jnp.exp(s - m_new)
    l_sc[...] = alpha * l_sc[...] + jnp.sum(p, axis=-1, keepdims=True)
    acc_sc[...] = alpha * acc_sc[...] + jnp.dot(
        p.astype(v.dtype), v, preferred_element_type=jnp.float32)
    m_sc[...] = m_new

    @pl.when(ki == pl.num_programs(2) - 1)
    def _():
        # Exact reciprocal keeps the f32 reference check tight; switch to approx=True
        # (EUP vrcp, otherwise idle in the epilogue) if the accuracy budget allows.
        o_ref[0] = (acc_sc[...] * pl.reciprocal(l_sc[...], approx=False)
                    ).astype(o_ref.dtype)


def cross_attention(x, wq, bq, wk, bk, wv, bv):
    """x: (B, S, H); wq/wk/wv: (H, H) PyTorch nn.Linear weights; b*: (H,) biases."""
    B, S, H = x.shape
    dtype = x.dtype
    itemsize = jnp.dtype(dtype).itemsize
    inv_scale = 1.0 / math.sqrt(float(H))

    vmem_cap = _vmem_capacity_bytes()
    vmem_ceiling = int(vmem_cap * 0.8)      # ~51 MiB on v7x, ~102 MiB on v5e/v6e
    tile_budget = int(vmem_cap * 0.6)       # working-set budget when picking tiles

    # nn.Linear computes y = x @ W^T + b.  Fuse Q/K/V into one wide matmul and fold
    # the 1/sqrt(H) attention scale into the Q projection (wrapper glue, done once).
    wqkv_t = jnp.concatenate([wq.T * inv_scale, wk.T, wv.T], axis=1).astype(dtype)   # (H, 3H)
    bqkv = jnp.concatenate([bq * inv_scale, bk, bv]).reshape(1, 3 * H).astype(jnp.float32)

    # ---------------- Stage 1: projection over flattened (B*S, H) rows ----------------
    M = B * S
    x2d = x.reshape(M, H)
    w_bytes = H * 3 * H * itemsize

    def proj_fits(tm):
        return (2 * tm * H * itemsize          # x tile (double-buffered)
                + w_bytes + 3 * H * 4          # fused weight + bias
                + 2 * 3 * tm * H * itemsize    # q/k/v output tiles (double-buffered)
                + tm * 3 * H * 4               # f32 qkv intermediate
                ) <= tile_budget

    TM = _pick_tile(M, (2048, 1024, 512, 256, 128, 64, 32, 16, 8), proj_fits)
    TM = _shrink_for_two_programs(TM, M)       # both v7x TensorCores get work

    # The fused weight's index_map is constant (never re-DMAs): when it is big, a single
    # buffer avoids a dead second pipeline buffer (critical on v7x's 64 MiB VMEM).
    w_buffers = 1 if w_bytes > (4 << 20) else None

    proj_step_bytes = (TM * H + 3 * H + 3 * TM * H) * itemsize + w_bytes + TM * 3 * H * 4
    q2d, k2d, v2d = pl.pallas_call(
        _qkv_proj_kernel,
        out_shape=tuple(jax.ShapeDtypeStruct((M, H), dtype) for _ in range(3)),
        grid_spec=pltpu.PrefetchScalarGridSpec(
            num_scalar_prefetch=0,
            grid=(M // TM,),
            in_specs=[
                _spec((TM, H), lambda i: (i, 0)),
                _spec((H, 3 * H), lambda i: (0, 0), buffers=w_buffers),
                _spec((1, 3 * H), lambda i: (0, 0)),
            ],
            out_specs=[
                _spec((TM, H), lambda i: (i, 0)),
                _spec((TM, H), lambda i: (i, 0)),
                _spec((TM, H), lambda i: (i, 0)),
            ],
        ),
        compiler_params=pltpu.CompilerParams(
            dimension_semantics=("parallel",),
            vmem_limit_bytes=_vmem_budget(proj_step_bytes, 0, vmem_ceiling)),
    )(x2d, wqkv_t, bqkv)

    q = q2d.reshape(B, S, H)
    k = k2d.reshape(B, S, H)
    v = v2d.reshape(B, S, H)
    # TODO(synk): for H < 128 the MXU contraction/lane axis is under-fed; packing batches
    # into the lane axis would lift utilization but requires a different tiling layout.

    # ---------------- Stage 2: flash attention (online softmax) ----------------
    def attn_fits(tq, tk):
        return (2 * tq * H * itemsize           # q tile (double-buffered)
                + 2 * 3 * tk * H * itemsize     # k + v tiles (up to triple-buffered)
                + 2 * tq * H * itemsize         # output tile
                + (2 * tq * 128 + tq * H) * 4   # m / l (lane-padded) / acc scratch, f32
                + 3 * tq * tk * 4               # s / p f32 temporaries
                ) <= tile_budget

    # Maximize TQ first: K and V are re-streamed from HBM once per q-tile, so attention
    # HBM traffic scales with S/TQ — the dominant lever at mem-bound (v5e/v6e especially).
    TQ = _pick_tile(S, (2048, 1024, 512, 256, 128, 64, 32, 16, 8),
                    lambda t: attn_fits(t, min(t, 128)))
    if B * (S // TQ) < 2:                       # keep both v7x TensorCores busy
        TQ = _shrink_for_two_programs(TQ, S)
    # Then the largest TK that fits: fewer ki steps = fewer acc rescales + less overhead.
    TK = _pick_tile(S, (512, 256, 128, 64, 32, 16, 8), lambda t: attn_fits(TQ, t))
    grid = (B, S // TQ, S // TK)

    # K/V block indices change every inner step; deepen their pipeline only when there
    # are enough kv steps for a third buffer to actually hide DMA latency.
    kv_buffers = 3 if (S // TK) >= 3 else None

    attn_step_bytes = (TQ * H + 2 * TK * H + TQ * H) * itemsize + 3 * TQ * TK * 4
    attn_scratch_bytes = (2 * TQ * 128 + TQ * H) * 4

    out = pl.pallas_call(
        _flash_attn_kernel,
        out_shape=jax.ShapeDtypeStruct((B, S, H), dtype),
        grid_spec=pltpu.PrefetchScalarGridSpec(
            num_scalar_prefetch=0,
            grid=grid,
            in_specs=[
                _spec((1, TQ, H), lambda b, qi, ki: (b, qi, 0)),
                _spec((1, TK, H), lambda b, qi, ki: (b, ki, 0), buffers=kv_buffers),
                _spec((1, TK, H), lambda b, qi, ki: (b, ki, 0), buffers=kv_buffers),
            ],
            out_specs=pl.BlockSpec((1, TQ, H), lambda b, qi, ki: (b, qi, 0)),
            scratch_shapes=[
                pltpu.VMEM((TQ, 1), jnp.float32),   # running max m
                pltpu.VMEM((TQ, 1), jnp.float32),   # running denom l
                pltpu.VMEM((TQ, H), jnp.float32),   # f32 output accumulator
            ],
        ),
        compiler_params=pltpu.CompilerParams(
            dimension_semantics=("parallel", "parallel", "arbitrary"),
            vmem_limit_bytes=_vmem_budget(attn_step_bytes, attn_scratch_bytes, vmem_ceiling)),
    )(q, k, v)

    return out


def _reference(x, wq, bq, wk, bk, wv, bv):
    # Pure-JAX reference mirroring the PyTorch forward exactly.
    H = x.shape[-1]
    hp = jax.lax.Precision.HIGHEST
    q = jnp.einsum("bsh,oh->bso", x, wq, precision=hp) + bq
    k = jnp.einsum("bsh,oh->bso", x, wk, precision=hp) + bk
    v = jnp.einsum("bsh,oh->bso", x, wv, precision=hp) + bv
    scores = jnp.einsum("bqh,bkh->bqk", q, k, precision=hp) / (H ** 0.5)
    attn = jax.nn.softmax(scores, axis=-1)
    return jnp.einsum("bqk,bkh->bqh", attn, v, precision=hp)


if __name__ == "__main__":
    B, S, H = 2, 8, 32
    key = jax.random.PRNGKey(0)
    kx, kq, kbq, kk, kbk, kv, kbv = jax.random.split(key, 7)

    x = jax.random.normal(kx, (B, S, H), dtype=jnp.float32)
    # Deterministic synthetic nn.Linear params: (H, H) weights, (H,) biases.
    bound = 1.0 / (H ** 0.5)
    wq = jax.random.uniform(kq, (H, H), minval=-bound, maxval=bound, dtype=jnp.float32)
    bq = jax.random.uniform(kbq, (H,), minval=-bound, maxval=bound, dtype=jnp.float32)
    wk = jax.random.uniform(kk, (H, H), minval=-bound, maxval=bound, dtype=jnp.float32)
    bk = jax.random.uniform(kbk, (H,), minval=-bound, maxval=bound, dtype=jnp.float32)
    wv = jax.random.uniform(kv, (H, H), minval=-bound, maxval=bound, dtype=jnp.float32)
    bv = jax.random.uniform(kbv, (H,), minval=-bound, maxval=bound, dtype=jnp.float32)

    out = cross_attention(x, wq, bq, wk, bk, wv, bv)
    out = jax.block_until_ready(out)
    assert out.shape == (B, S, H)

    ref = _reference(x, wq, bq, wk, bk, wv, bv)
    assert jnp.allclose(out, ref, atol=2e-4, rtol=2e-4), "mismatch vs reference"

    print("KERNEL_OK")
</pallas_src>

<mosaic_0001>
module attributes {stable_mosaic.version = 11 : i64} {
  func.func @_qkv_proj_kernel(%arg0: i32, %arg1: memref<8x32xf32, #tpu.memory_space<vmem>>, %arg2: memref<32x96xf32, #tpu.memory_space<vmem>>, %arg3: memref<1x96xf32, #tpu.memory_space<vmem>>, %arg4: memref<8x32xf32, #tpu.memory_space<vmem>>, %arg5: memref<8x32xf32, #tpu.memory_space<vmem>>, %arg6: memref<8x32xf32, #tpu.memory_space<vmem>>) attributes {dimension_semantics = [#tpu.dimension_semantics<parallel>], iteration_bounds = array<i64: 2>, scalar_prefetch = 0 : i64, scratch_operands = 0 : i64, tpu.core_type = #tpu.core_type<tc>, window_params = [{transform_indices = @transform_0, window_bounds = array<i64: 8, 32>}, {pipeline_mode = #tpu.pipeline_mode<synchronous>, transform_indices = @transform_1, window_bounds = array<i64: 32, 96>}, {pipeline_mode = #tpu.pipeline_mode<synchronous>, transform_indices = @transform_2, window_bounds = array<i64: 1, 96>}, {transform_indices = @transform_3, window_bounds = array<i64: 8, 32>}, {transform_indices = @transform_4, window_bounds = array<i64: 8, 32>}, {transform_indices = @transform_5, window_bounds = array<i64: 8, 32>}]} {
    %c0 = arith.constant 0 : index
    %c0_0 = arith.constant 0 : index
    %0 = vector.load %arg1[%c0, %c0_0] : memref<8x32xf32, #tpu.memory_space<vmem>>, vector<8x32xf32>
    %c0_1 = arith.constant 0 : index
    %c0_2 = arith.constant 0 : index
    %1 = vector.load %arg2[%c0_1, %c0_2] : memref<32x96xf32, #tpu.memory_space<vmem>>, vector<32x96xf32>
    %cst = arith.constant dense<0.000000e+00> : vector<8x96xf32>
    %2 = tpu.matmul %0, %1, %cst {dimension_numbers = #tpu.dot_dimension_numbers<[1], [0], [0], [1], [0, 0, 1, 1], [], []>} : vector<8x32xf32>, vector<32x96xf32>, vector<8x96xf32> -> vector<8x96xf32>
    %c0_3 = arith.constant 0 : index
    %c0_4 = arith.constant 0 : index
    %3 = vector.load %arg3[%c0_3, %c0_4] : memref<1x96xf32, #tpu.memory_space<vmem>>, vector<1x96xf32>
    %4 = vector.broadcast %3 : vector<1x96xf32> to vector<8x96xf32>
    %5 = arith.addf %2, %4 : vector<8x96xf32>
    %6 = vector.extract_strided_slice %5 {offsets = [0, 0], sizes = [8, 32], strides = [1, 1]} : vector<8x96xf32> to vector<8x32xf32>
    %c0_5 = arith.constant 0 : index
    %c0_6 = arith.constant 0 : index
    %7 = vector.load %arg4[%c0_5, %c0_6] : memref<8x32xf32, #tpu.memory_space<vmem>>, vector<8x32xf32>
    tpu.vector_store %arg4[%c0_5, %c0_6], %6 {strides = array<i32>} : memref<8x32xf32, #tpu.memory_space<vmem>>, vector<8x32xf32>,
    %8 = vector.extract_strided_slice %5 {offsets = [0, 32], sizes = [8, 32], strides = [1, 1]} : vector<8x96xf32> to vector<8x32xf32>
    %c0_7 = arith.constant 0 : index
    %c0_8 = arith.constant 0 : index
    %9 = vector.load %arg5[%c0_7, %c0_8] : memref<8x32xf32, #tpu.memory_space<vmem>>, vector<8x32xf32>
    tpu.vector_store %arg5[%c0_7, %c0_8], %8 {strides = array<i32>} : memref<8x32xf32, #tpu.memory_space<vmem>>, vector<8x32xf32>,
    %10 = vector.extract_strided_slice %5 {offsets = [0, 64], sizes = [8, 32], strides = [1, 1]} : vector<8x96xf32> to vector<8x32xf32>
    %c0_9 = arith.constant 0 : index
    %c0_10 = arith.constant 0 : index
    %11 = vector.load %arg6[%c0_9, %c0_10] : memref<8x32xf32, #tpu.memory_space<vmem>>, vector<8x32xf32>
    tpu.vector_store %arg6[%c0_9, %c0_10], %10 {strides = array<i32>} : memref<8x32xf32, #tpu.memory_space<vmem>>, vector<8x32xf32>,
    return
  }
  func.func @transform_0(%arg0: i32) -> (i32, i32) {
    %c0_i32 = arith.constant 0 : i32
    %c0_i32_0 = arith.constant 0 : i32
    return %arg0, %c0_i32 : i32, i32
  }
  func.func @transform_1(%arg0: i32) -> (i32, i32) {
    %c0_i32 = arith.constant 0 : i32
    %c0_i32_0 = arith.constant 0 : i32
    %c0_i32_1 = arith.constant 0 : i32
    return %c0_i32, %c0_i32_0 : i32, i32
  }
  func.func @transform_2(%arg0: i32) -> (i32, i32) {
    %c0_i32 = arith.constant 0 : i32
    %c0_i32_0 = arith.constant 0 : i32
    %c0_i32_1 = arith.constant 0 : i32
    return %c0_i32, %c0_i32_0 : i32, i32
  }
  func.func @transform_3(%arg0: i32) -> (i32, i32) {
    %c0_i32 = arith.constant 0 : i32
    %c0_i32_0 = arith.constant 0 : i32
    return %arg0, %c0_i32 : i32, i32
  }
  func.func @transform_4(%arg0: i32) -> (i32, i32) {
    %c0_i32 = arith.constant 0 : i32
    %c0_i32_0 = arith.constant 0 : i32
    return %arg0, %c0_i32 : i32, i32
  }
  func.func @transform_5(%arg0: i32) -> (i32, i32) {
    %c0_i32 = arith.constant 0 : i32
    %c0_i32_0 = arith.constant 0 : i32
    return %arg0, %c0_i32 : i32, i32
  }
}

</mosaic_0001>

<llo_original>
// kernel: tpu_custom_call.1
$region0: #{tpu_custom_call.1}
  #allocation0 [shape = 'u32[]', space=smem, size = 0x4, offset = 0x4, fixed_abs, tag = 'smem constant byte address 0x4 - core index']
  #allocation1 [shape = 'u32[144,128]{1,0:T(1,128)}', space=vmem, size = 0x12000, scoped, tag = 'internal scratch']
  %s0 = inlined_call_operand.hbm [shape: f32[16,32], index: 0, kind: input, shape index: {}]
  %s1 = inlined_call_operand.hbm [shape: f32[32,96], index: 1, kind: input, shape index: {}]
  %s2 = inlined_call_operand.vmem [shape: f32[1,96], index: 2, kind: input, shape index: {}]
  %s3 = inlined_call_operand.hbm [shape: f32[16,32], index: 3, kind: output, shape index: {0}]
  %s4 = inlined_call_operand.hbm [shape: f32[16,32], index: 4, kind: output, shape index: {1}]
  %s5 = inlined_call_operand.hbm [shape: f32[16,32], index: 5, kind: output, shape index: {2}]
  %6 = xla_tuple %s3, %s4, %s5
  %s7 = sld [smem:[#allocation0]]
  $region69: #{tpu_custom_call.1} parent=0
    _
  %s9 = ssub.s32 1, %s7
  %s10 = scalar_select 0, %s9, %s7
  $region1: #{tpu_custom_call.1} parent=0
    #allocation2 [shape = 'u8[8192]{0}', space=vmem, size = 0x2000, scoped, tag = 'input window, operand 0']
    #allocation3 [shape = 's32[2]{0}', space=sflag, size = 0x8, scoped, tag = 'scoped memory for tpu_custom_call.1']
    #allocation4 [shape = 's32[2]{0}', space=sflag, size = 0x8, scoped, tag = 'scoped memory for tpu_custom_call.1']
    #allocation5 [shape = 'u8[16384]{0}', space=vmem, size = 0x4000, scoped, tag = 'input window, operand 1, single buffered']
    #allocation6 [shape = 's32[1]{0}', space=sflag, size = 0x4, scoped, tag = 'scoped memory for tpu_custom_call.1']
    #allocation7 [shape = 'u8[8192]{0}', space=vmem, size = 0x2000, scoped, tag = 'output window, operand 0']
    #allocation8 [shape = 'u8[8192]{0}', space=vmem, size = 0x2000, scoped, tag = 'output window, operand 1']
    #allocation9 [shape = 's32[2]{0}', space=sflag, size = 0x8, scoped, tag = 'scoped memory for tpu_custom_call.1']
    #allocation10 [shape = 'u8[8192]{0}', space=vmem, size = 0x2000, scoped, tag = 'output window, operand 2']
    %11 = vsyncpa [#allocation3], 0
    %s12 = scalar_lea.sflag [#allocation3], 1
    %13 = vsyncpa %s12, 0
    %14 = vsyncpa [#allocation6], 0
    %15 = vsyncpa [#allocation4], 0
    %s16 = scalar_lea.sflag [#allocation4], 1
    %17 = vsyncpa %s16, 0
    %18 = vsyncpa [#allocation9], 0
    %s19 = scalar_lea.sflag [#allocation9], 1
    %20 = vsyncpa %s19, 0
    loop: start=0, step=1, limit=4
    $region2: #{tpu_custom_call.1} parent=1 // loop_pre_header
      _
    $region3: #{tpu_custom_call.1} parent=1 // loop_header
      %s22 = sphi 0, %s26
      %p23 = scmp.ge.s32.totalorder %s22, 4
      %s32 = sphi 0, %s34
      %s35 = sphi 0, %s32
      %s36 = sphi 0, %s35
      %s52 = sphi 0, %s36
      %s56 = sphi 0, %s56
      %s58 = sphi 0, %s56
      %s59 = sphi 0, %s58
      %s73 = sphi 0, %s59
      %s77 = sphi 0, %s77
      %s79 = sphi 0, %s77
      %s80 = sphi 0, %s79
      %s94 = sphi 0, %s80
      %s100 = sphi 0, %s102
      %s103 = sphi 0, %s100
      %s104 = sphi 0, %s103
      %s120 = sphi 0, %s104
      %s126 = sphi 0, %s128
      %s129 = sphi 0, %s126
      %s130 = sphi 0, %s129
      %s146 = sphi 0, %s130
      %s152 = sphi 0, %s154
      %s155 = sphi 0, %s152
      %s156 = sphi 0, %s155
      %s172 = sphi 0, %s156
    $region4: #{tpu_custom_call.1} parent=1 // loop_header_branch
      %25 = sbr.rel (%p23) target = $region8
    $region5: #{tpu_custom_call.1} parent=1 // loop_body
      %s27 = ssub.s32 %s22, 1
      %s28 = ssub.s32 %s22, 2
      %s29 = sadd.s32 %s22, 1
      %s30 = ssub.s32 %s22, %s29
      %p31 = scmp.eq.s32.totalorder %s30, 0
      %s33 = sadd.s32 %s32, 1
      %s34 = scalar_select %p31, %s32, %s33
      %p37 = pneg %p31
      %p38 = scmp.eq.s32.totalorder %s22, 1
      %p39 = por %p37, %p38
      %p40 = scmp.ne.s32.totalorder %s32, %s35
      %p41 = scmp.eq.s32.totalorder %s22, 0
      %p42 = por %p40, %p41
      %p43 = scmp.ne.s32.totalorder %s32, %s35
      %p44 = scmp.eq.s32.totalorder %s27, 1
      %p45 = por %p43, %p44
      %p46 = scmp.ne.s32.totalorder %s35, %s36
      %p47 = scmp.eq.s32.totalorder %s27, 0
      %p48 = por %p46, %p47
      %p49 = scmp.ne.s32.totalorder %s35, %s36
      %p50 = scmp.eq.s32.totalorder %s28, 1
      %p51 = por %p49, %p50
      %p53 = scmp.ne.s32.totalorder %s36, %s52
      %p54 = scmp.eq.s32.totalorder %s28, 0
      %p55 = por %p53, %p54
      %s57 = sadd.s32 %s56, 1
      %p60 = scmp.eq.s32.totalorder %s22, 1
      %p61 = scmp.ne.s32.totalorder %s56, %s58
      %p62 = scmp.eq.s32.totalorder %s22, 0
      %p63 = por %p61, %p62
      %p64 = scmp.ne.s32.totalorder %s56, %s58
      %p65 = scmp.eq.s32.totalorder %s27, 1
      %p66 = por %p64, %p65
      %p67 = scmp.ne.s32.totalorder %s58, %s59
      %p68 = scmp.eq.s32.totalorder %s27, 0
      %p69 = por %p67, %p68
      %p70 = scmp.ne.s32.totalorder %s58, %s59
      %p71 = scmp.eq.s32.totalorder %s28, 1
      %p72 = por %p70, %p71
      %p74 = scmp.ne.s32.totalorder %s59, %s73
      %p75 = scmp.eq.s32.totalorder %s28, 0
      %p76 = por %p74, %p75
      %s78 = sadd.s32 %s77, 1
      %p81 = scmp.eq.s32.totalorder %s22, 1
      %p82 = scmp.ne.s32.totalorder %s77, %s79
      %p83 = scmp.eq.s32.totalorder %s22, 0
      %p84 = por %p82, %p83
      %p85 = scmp.ne.s32.totalorder %s77, %s79
      %p86 = scmp.eq.s32.totalorder %s27, 1
      %p87 = por %p85, %p86
      %p88 = scmp.ne.s32.totalorder %s79, %s80
      %p89 = scmp.eq.s32.totalorder %s27, 0
      %p90 = por %p88, %p89
      %p91 = scmp.ne.s32.totalorder %s79, %s80
      %p92 = scmp.eq.s32.totalorder %s28, 1
      %p93 = por %p91, %p92
      %p95 = scmp.ne.s32.totalorder %s80, %s94
      %p96 = scmp.eq.s32.totalorder %s28, 0
      %p97 = por %p95, %p96
      %s98 = ssub.s32 %s22, %s29
      %p99 = scmp.eq.s32.totalorder %s98, 0
      %s101 = sadd.s32 %s100, 1
      %s102 = scalar_select %p99, %s100, %s101
      %p105 = pneg %p99
      %p106 = scmp.eq.s32.totalorder %s22, 1
      %p107 = por %p105, %p106
      %p108 = scmp.ne.s32.totalorder %s100, %s103
      %p109 = scmp.eq.s32.totalorder %s22, 0
      %p110 = por %p108, %p109
      %p111 = scmp.ne.s32.totalorder %s100, %s103
      %p112 = scmp.eq.s32.totalorder %s27, 1
      %p113 = por %p111, %p112
      %p114 = scmp.ne.s32.totalorder %s103, %s104
      %p115 = scmp.eq.s32.totalorder %s27, 0
      %p116 = por %p114, %p115
      %p117 = scmp.ne.s32.totalorder %s103, %s104
      %p118 = scmp.eq.s32.totalorder %s28, 1
      %p119 = por %p117, %p118
      %p121 = scmp.ne.s32.totalorder %s104, %s120
      %p122 = scmp.eq.s32.totalorder %s28, 0
      %p123 = por %p121, %p122
      %s124 = ssub.s32 %s22, %s29
      %p125 = scmp.eq.s32.totalorder %s124, 0
      %s127 = sadd.s32 %s126, 1
      %s128 = scalar_select %p125, %s126, %s127
      %p131 = pneg %p125
      %p132 = scmp.eq.s32.totalorder %s22, 1
      %p133 = por %p131, %p132
      %p134 = scmp.ne.s32.totalorder %s126, %s129
      %p135 = scmp.eq.s32.totalorder %s22, 0
      %p136 = por %p134, %p135
      %p137 = scmp.ne.s32.totalorder %s126, %s129
      %p138 = scmp.eq.s32.totalorder %s27, 1
      %p139 = por %p137, %p138
      %p140 = scmp.ne.s32.totalorder %s129, %s130
      %p141 = scmp.eq.s32.totalorder %s27, 0
      %p142 = por %p140, %p141
      %p143 = scmp.ne.s32.totalorder %s129, %s130
      %p144 = scmp.eq.s32.totalorder %s28, 1
      %p145 = por %p143, %p144
      %p147 = scmp.ne.s32.totalorder %s130, %s146
      %p148 = scmp.eq.s32.totalorder %s28, 0
      %p149 = por %p147, %p148
      %s150 = ssub.s32 %s22, %s29
      %p151 = scmp.eq.s32.totalorder %s150, 0
      %s153 = sadd.s32 %s152, 1
      %s154 = scalar_select %p151, %s152, %s153
      %p157 = pneg %p151
      %p158 = scmp.eq.s32.totalorder %s22, 1
      %p159 = por %p157, %p158
      %p160 = scmp.ne.s32.totalorder %s152, %s155
      %p161 = scmp.eq.s32.totalorder %s22, 0
      %p162 = por %p160, %p161
      %p163 = scmp.ne.s32.totalorder %s152, %s155
      %p164 = scmp.eq.s32.totalorder %s27, 1
      %p165 = por %p163, %p164
      %p166 = scmp.ne.s32.totalorder %s155, %s156
      %p167 = scmp.eq.s32.totalorder %s27, 0
      %p168 = por %p166, %p167
      %p169 = scmp.ne.s32.totalorder %s155, %s156
      %p170 = scmp.eq.s32.totalorder %s28, 1
      %p171 = por %p169, %p170
      %p173 = scmp.ne.s32.totalorder %s156, %s172
      %p174 = scmp.eq.s32.totalorder %s28, 0
      %p175 = por %p173, %p174
      %p176 = scmp.le.s32.totalorder 1, %s22
      %p177 = scmp.lt.s32.totalorder %s22, 3
      %p178 = pnand %p176, %p177
      %p179 = pneg %p178
      // Predicated region
      $region9: #{tpu_custom_call.1} parent=5 // pred_check
        _
      $region10: #{tpu_custom_call.1} parent=5 // pred_check_branch
        %181 = sbr.rel (%p178) target = $region12
      $region11: #{tpu_custom_call.1} parent=5 // pred_region
        %s182 = ssub.s32 %s22, 1
        // Predicated region
        $region13: #{tpu_custom_call.1} parent=11 // pred_check
          %p183 = pneg %p69
        $region14: #{tpu_custom_call.1} parent=11 // pred_check_branch
          %185 = sbr.rel (%p183) target = $region16
        $region15: #{tpu_custom_call.1} parent=11 // pred_region
          %s187 = ssub.s32 512, 512
          %188 = vsyncadd [#allocation6], %s187
          %s189 = sshll.u32 [#allocation5], 4
          %s190 = int_to_ptr.vmem [resolvable:$true] %s189
          %195 = dma.hbm_to_vmem [thread:$0]  %s1, 512, %s190, [#allocation6], 128, 128, 8
        $region16: #{tpu_custom_call.1} parent=11 // pred_fallthru
          _
        // Predicated region
        $region17: #{tpu_custom_call.1} parent=11 // pred_check
          %p196 = pneg %p90
        $region18: #{tpu_custom_call.1} parent=11 // pred_check_branch
          %198 = sbr.rel (%p196) target = $region20
        $region19: #{tpu_custom_call.1} parent=11 // pred_region
          _
        $region20: #{tpu_custom_call.1} parent=11 // pred_fallthru
          _
      $region12: #{tpu_custom_call.1} parent=5 // pred_fallthru
        _
      %p199 = scmp.lt.s32.totalorder %s22, 2
      // Predicated region
      $region21: #{tpu_custom_call.1} parent=5 // pred_check
        %p200 = pneg %p199
      $region22: #{tpu_custom_call.1} parent=5 // pred_check_branch
        %202 = sbr.rel (%p200) target = $region24
      $region23: #{tpu_custom_call.1} parent=5 // pred_region
        // Predicated region
        $region25: #{tpu_custom_call.1} parent=23 // pred_check
          %p203 = pneg %p42
        $region26: #{tpu_custom_call.1} parent=23 // pred_check_branch
          %205 = sbr.rel (%p203) target = $region28
        $region27: #{tpu_custom_call.1} parent=23 // pred_region
          %s206 = sand.u32 %s32, 1
          %s207 = scalar_lea.sflag [#allocation3], %s206
          %s208 = sand.u32 %s32, 1
          %s209 = smul.addr %s208, 8
          %s210 = scalar_lea.vmem [#allocation2], %s209
          %s212 = ssub.s32 128, 128
          %213 = vsyncadd %s207, %s212
          %s214 = smul.addr %s22, 128
          %s215 = scalar_lea.hbm %s0, %s214
          %s217 = sshll.u32 %s210, 4
          %s218 = int_to_ptr.vmem [resolvable:$true] %s217
          %220 = dma.hbm_to_vmem [thread:$0]  %s215, 128, %s218, %s207
        $region28: #{tpu_custom_call.1} parent=23 // pred_fallthru
          _
      $region24: #{tpu_custom_call.1} parent=5 // pred_fallthru
        _
      %p221 = scmp.le.s32.totalorder 1, %s22
      %p222 = scmp.lt.s32.totalorder %s22, 3
      %p223 = pnand %p221, %p222
      %p224 = pneg %p223
      // Predicated region
      $region29: #{tpu_custom_call.1} parent=5 // pred_check
        _
      $region30: #{tpu_custom_call.1} parent=5 // pred_check_branch
        %226 = sbr.rel (%p223) target = $region32
      $region31: #{tpu_custom_call.1} parent=5 // pred_region
        %s227 = ssub.s32 %s22, 1
        %s228 = sand.u32 %s35, 1
        %s229 = scalar_lea.sflag [#allocation3], %s228
        %s230 = sand.u32 %s35, 1
        %s231 = smul.addr %s230, 8
        %s232 = scalar_lea.vmem [#allocation2], %s231
        // Predicated region
        $region33: #{tpu_custom_call.1} parent=31 // pred_check
          %p233 = pneg %p48
        $region34: #{tpu_custom_call.1} parent=31 // pred_check_branch
          %235 = sbr.rel (%p233) target = $region36
        $region35: #{tpu_custom_call.1} parent=31 // pred_region
          %236 = dma.done %s229, 128
        $region36: #{tpu_custom_call.1} parent=31 // pred_fallthru
          _
        // Predicated region
        $region37: #{tpu_custom_call.1} parent=31 // pred_check
          %p237 = pneg %p69
        $region38: #{tpu_custom_call.1} parent=31 // pred_check_branch
          %239 = sbr.rel (%p237) target = $region40
        $region39: #{tpu_custom_call.1} parent=31 // pred_region
          %240 = dma.done [#allocation6], 512
        $region40: #{tpu_custom_call.1} parent=31 // pred_fallthru
          _
        %s241 = sand.u32 %s35, 1
        %s242 = scalar_lea.sflag [#allocation3], %s241
        %s243 = sand.u32 %s35, 1
        %s244 = smul.addr %s243, 8
        %s245 = scalar_lea.vmem [#allocation2], %s244
        %p246 = pneg %p48
        %p247 = pneg %p45
        %p248 = pneg %p69
        %p249 = pneg %p66
        %p250 = pneg %p90
        %p251 = pneg %p87
        %p252 = pneg %p116
        %p253 = pneg %p113
        %s254 = sand.u32 %s103, 1
        %s255 = scalar_lea.sflag [#allocation4], %s254
        %s256 = sand.u32 %s103, 1
        %s257 = smul.addr %s256, 8
        %s258 = scalar_lea.vmem [#allocation7], %s257
        %p259 = pneg %p142
        %p260 = pneg %p139
        %s261 = sand.u32 %s27, 1
        %s262 = scalar_lea.sflag [#allocation9], %s261
        %s263 = sand.u32 %s129, 1
        %s264 = smul.addr %s263, 8
        %s265 = scalar_lea.vmem [#allocation8], %s264
        %p266 = pneg %p168
        %p267 = pneg %p165
        %s268 = sand.u32 %s27, 1
        %s269 = scalar_lea.sflag [#allocation9], %s268
        %s270 = sand.u32 %s155, 1
        %s271 = smul.addr %s270, 8
        %s272 = scalar_lea.vmem [#allocation10], %s271
        %v273 = vld [vmem:[%s232] sm:$0xff]
        %v274 = vld [vmem:[#allocation5] sm:$0xff]
        %v275 = vld [vmem:[#allocation5 + $0x8] sm:$0xff]
        %v276 = vld [vmem:[#allocation5 + $0x10] sm:$0xff]
        %v277 = vld [vmem:[#allocation5 + $0x18] sm:$0xff]
        %v278 = vld [vmem:[%s2] sm:$0x1]
        %v280 = vlaneseq
        %v281 = vshrl.u32 %v280, 7
        %v282 = vsub.s32 0, %v281
        %v283 = vrot.slane %v278, %v282
        %vm285 = vcmask 261120
        %v287 = vsel %vm285, %v273, 0
        %289 = vmatprep.subr.mxu0 0.0
        %290 = vmatpush1.msra.mxu0 0.0
        %291 = vmatprep.subr.mxu0 0.0
        %292 = vmatpush1.msra.mxu0 0.0
        %293 = vmatprep.subr.mxu0 0.0
        %294 = vmatpush1.msra.mxu0 0.0
        %295 = vmatprep.subr.mxu0 0.0
        %296 = vmatpush1.msra.mxu0 0.0
        %297 = vmatprep.subr.mxu0 0.0
        %298 = vmatpush1.msra.mxu0 0.0
        %299 = vmatprep.subr.mxu0 0.0
        %300 = vmatpush1.msra.mxu0 0.0
        %301 = vmatprep.subr.mxu0 0.0
        %302 = vmatpush1.msra.mxu0 0.0
        %303 = vmatprep.subr.mxu0 0.0
        %304 = vmatpush1.msra.mxu0 0.0
        %305 = vmatprep.subr.mxu0 0.0
        %306 = vmatpush1.msra.mxu0 0.0
        %307 = vmatprep.subr.mxu0 0.0
        %308 = vmatpush1.msra.mxu0 0.0
        %309 = vmatprep.subr.mxu0 0.0
        %310 = vmatpush1.msra.mxu0 0.0
        %311 = vmatprep.subr.mxu0 0.0
        %312 = vmatpush1.msra.mxu0 0.0
        %313 = vmatprep.subr.mxu0 0.0
        %314 = vmatpush1.msra.mxu0 %v277
        %315 = vmatprep.subr.mxu0 0.0
        %316 = vmatpush1.msra.mxu0 %v276
        %317 = vmatprep.subr.mxu0 0.0
        %318 = vmatpush1.msra.mxu0 %v275
        %319 = vmatprep.subr.mxu0 0.0
        %320 = vmatpush1.msra.mxu0 %v274
        %321 = vmatprep.subr.mxu0 0.0
        %322 = vmatpush2.msra.mxu0 0.0
        %323 = vmatprep.subr.mxu0 0.0
        %324 = vmatpush2.msra.mxu0 0.0
        %325 = vmatprep.subr.mxu0 0.0
        %326 = vmatpush2.msra.mxu0 0.0
        %327 = vmatprep.subr.mxu0 0.0
        %328 = vmatpush2.msra.mxu0 0.0
        %329 = vmatprep.subr.mxu0 0.0
        %330 = vmatpush2.msra.mxu0 0.0
        %331 = vmatprep.subr.mxu0 0.0
        %332 = vmatpush2.msra.mxu0 0.0
        %333 = vmatprep.subr.mxu0 0.0
        %334 = vmatpush2.msra.mxu0 0.0
        %335 = vmatprep.subr.mxu0 0.0
        %336 = vmatpush2.msra.mxu0 0.0
        %337 = vmatprep.subr.mxu0 0.0
        %338 = vmatpush2.msra.mxu0 0.0
        %339 = vmatprep.subr.mxu0 0.0
        %340 = vmatpush2.msra.mxu0 0.0
        %341 = vmatprep.subr.mxu0 0.0
        %342 = vmatpush2.msra.mxu0 0.0
        %343 = vmatprep.subr.mxu0 0.0
        %344 = vmatpush2.msra.mxu0 0.0
        %345 = vmatprep.subr.mxu0 0.0
        %346 = vmatpush2.msra.mxu0 0.0
        %347 = vmatprep.subr.mxu0 0.0
        %348 = vmatpush2.msra.mxu0 0.0
        %349 = vmatprep.subr.mxu0 0.0
        %350 = vmatpush2.msra.mxu0 0.0
        %351 = vmatprep.subr.mxu0 0.0
        %352 = vmatpush2.msra.mxu0 0.0
        %353 = vmatprep.mubr.f32.mxu0 0.0
        %354 = vmatmul.mubr.f32.gmra.mxu0 %v287
        %v355 = vpop.f32.mrf.mxu0
        %v356 = vadd.f32 %v283, %v355
        %v357 = vpop.f32.mrf.mxu0
        %358 = vdwg.mxu0
        %359 = vst.msk [vmem:[%s258] sm:$0xff] %vm285, %v356
        %361 = vrot.lane.b32.xlu0 %v356, 96
        %v362 = vpop.permute.xlu0 %361
        %364 = vst.msk [vmem:[%s265] sm:$0xff] %vm285, %v362
        %365 = vrot.lane.b32.xlu0 %v356, 64
        %v366 = vpop.permute.xlu0 %365
        %368 = vst.msk [vmem:[%s272] sm:$0xff] %vm285, %v366
        %s369 = sand.u32 %s103, 1
        %s370 = scalar_lea.sflag [#allocation4], %s369
        %s371 = sand.u32 %s103, 1
        %s372 = smul.addr %s371, 8
        %s373 = scalar_lea.vmem [#allocation7], %s372
        %s374 = sand.u32 %s27, 1
        %s375 = scalar_lea.sflag [#allocation9], %s374
        %s376 = sand.u32 %s129, 1
        %s377 = smul.addr %s376, 8
        %s378 = scalar_lea.vmem [#allocation8], %s377
        %s379 = sand.u32 %s27, 1
        %s380 = scalar_lea.sflag [#allocation9], %s379
        %s381 = sand.u32 %s155, 1
        %s382 = smul.addr %s381, 8
        %s383 = scalar_lea.vmem [#allocation10], %s382
        // Predicated region
        $region41: #{tpu_custom_call.1} parent=31 // pred_check
          %p384 = pneg %p113
        $region42: #{tpu_custom_call.1} parent=31 // pred_check_branch
          %386 = sbr.rel (%p384) target = $region44
        $region43: #{tpu_custom_call.1} parent=31 // pred_region
          %s388 = ssub.s32 128, 128
          %389 = vsyncadd %s370, %s388
          %s390 = smul.addr %s27, 128
          %s391 = scalar_lea.hbm %s3, %s390
          %s393 = sshll.u32 %s373, 4
          %s394 = int_to_ptr.vmem [resolvable:$true] %s393
          %396 = dma.vmem_to_hbm [thread:$0]  %s394, 128, %s391, %s370
        $region44: #{tpu_custom_call.1} parent=31 // pred_fallthru
          _
        // Predicated region
        $region45: #{tpu_custom_call.1} parent=31 // pred_check
          %p397 = pneg %p139
        $region46: #{tpu_custom_call.1} parent=31 // pred_check_branch
          %399 = sbr.rel (%p397) target = $region48
        $region47: #{tpu_custom_call.1} parent=31 // pred_region
          %s401 = ssub.s32 128, 128
          %402 = vsyncadd %s375, %s401
          %s403 = smul.addr %s27, 128
          %s404 = scalar_lea.hbm %s4, %s403
          %s406 = sshll.u32 %s378, 4
          %s407 = int_to_ptr.vmem [resolvable:$true] %s406
          %409 = dma.vmem_to_hbm [thread:$0]  %s407, 128, %s404, %s375
        $region48: #{tpu_custom_call.1} parent=31 // pred_fallthru
          _
        // Predicated region
        $region49: #{tpu_custom_call.1} parent=31 // pred_check
          %p410 = pneg %p165
        $region50: #{tpu_custom_call.1} parent=31 // pred_check_branch
          %412 = sbr.rel (%p410) target = $region52
        $region51: #{tpu_custom_call.1} parent=31 // pred_region
          %s414 = ssub.s32 128, 128
          %415 = vsyncadd %s380, %s414
          %s416 = smul.addr %s27, 128
          %s417 = scalar_lea.hbm %s5, %s416
          %s419 = sshll.u32 %s383, 4
          %s420 = int_to_ptr.vmem [resolvable:$true] %s419
          %422 = dma.vmem_to_hbm [thread:$0]  %s420, 128, %s417, %s380
        $region52: #{tpu_custom_call.1} parent=31 // pred_fallthru
          _
      $region32: #{tpu_custom_call.1} parent=5 // pred_fallthru
        _
      %p423 = scmp.le.s32.totalorder 2, %s22
      // Predicated region
      $region53: #{tpu_custom_call.1} parent=5 // pred_check
        %p424 = pneg %p423
      $region54: #{tpu_custom_call.1} parent=5 // pred_check_branch
        %426 = sbr.rel (%p424) target = $region56
      $region55: #{tpu_custom_call.1} parent=5 // pred_region
        %s427 = ssub.s32 %s22, 2
        // Predicated region
        $region57: #{tpu_custom_call.1} parent=55 // pred_check
          %p428 = pneg %p119
        $region58: #{tpu_custom_call.1} parent=55 // pred_check_branch
          %430 = sbr.rel (%p428) target = $region60
        $region59: #{tpu_custom_call.1} parent=55 // pred_region
          %s431 = sand.u32 %s104, 1
          %s432 = scalar_lea.sflag [#allocation4], %s431
          %s433 = sand.u32 %s104, 1
          %s434 = smul.addr %s433, 8
          %s435 = scalar_lea.vmem [#allocation7], %s434
          %436 = dma.done %s432, 128
        $region60: #{tpu_custom_call.1} parent=55 // pred_fallthru
          _
        // Predicated region
        $region61: #{tpu_custom_call.1} parent=55 // pred_check
          %p437 = pneg %p145
        $region62: #{tpu_custom_call.1} parent=55 // pred_check_branch
          %439 = sbr.rel (%p437) target = $region64
        $region63: #{tpu_custom_call.1} parent=55 // pred_region
          %s440 = sand.u32 %s28, 1
          %s441 = scalar_lea.sflag [#allocation9], %s440
          %s442 = sand.u32 %s130, 1
          %s443 = smul.addr %s442, 8
          %s444 = scalar_lea.vmem [#allocation8], %s443
          %445 = dma.done %s441, 128
        $region64: #{tpu_custom_call.1} parent=55 // pred_fallthru
          _
        // Predicated region
        $region65: #{tpu_custom_call.1} parent=55 // pred_check
          %p446 = pneg %p171
        $region66: #{tpu_custom_call.1} parent=55 // pred_check_branch
          %448 = sbr.rel (%p446) target = $region68
        $region67: #{tpu_custom_call.1} parent=55 // pred_region
          %s449 = sand.u32 %s28, 1
          %s450 = scalar_lea.sflag [#allocation9], %s449
          %s451 = sand.u32 %s156, 1
          %s452 = smul.addr %s451, 8
          %s453 = scalar_lea.vmem [#allocation10], %s452
          %454 = dma.done %s450, 128
        $region68: #{tpu_custom_call.1} parent=55 // pred_fallthru
          _
      $region56: #{tpu_custom_call.1} parent=5 // pred_fallthru
        _
    $region6: #{tpu_custom_call.1} parent=1 // loop_footer
      %s26 = sadd.s32 1, %s22
    $region7: #{tpu_custom_call.1} parent=1 // loop_footer_branch
      %21 = sbr.rel target = $region3
    $region8: #{tpu_custom_call.1} parent=1 // loop_exit
      _
    %455 = vsyncpa [#allocation3], 1
    %s456 = scalar_lea.sflag [#allocation3], 1
    %457 = vsyncpa %s456, 1
    %458 = vsyncpa [#allocation6], 1
    %459 = vsyncpa [#allocation4], 1
    %s460 = scalar_lea.sflag [#allocation4], 1
    %461 = vsyncpa %s460, 1
    %462 = vsyncpa [#allocation9], 1
    %s463 = scalar_lea.sflag [#allocation9], 1
    %464 = vsyncpa %s463, 1

</llo_original>
